<compile_context>
chip_gen: v5e
topology: v5e:2x2
jax: 0.10.0
libtpu: 0.0.40
codegen_flags: <defaults>
</compile_context>

<pallas_src>
import functools

import jax
import jax.numpy as jnp
from jax.experimental import pallas as pl
from jax.experimental.pallas import tpu as pltpu


def _round_up(x, m):
    return ((x + m - 1) // m) * m


def _default_num_slices():
    # Shard the "parallel" grid axis only on parts with >1 TensorCore behind a
    # device (v4/v5p megacore, v7x); on v5e/v6e a 2nd slice is just a serial
    # loop plus duplicated writebacks.
    try:
        kind = jax.devices()[0].device_kind.lower()
    except Exception:
        return 1
    return 2 if any(tag in kind for tag in ("v4", "v5p", "7")) else 1


@functools.lru_cache(maxsize=None)
def _in_kernel_transpose_ok(n_classes, dtype_name):
    """Probe whether Mosaic lowers a (rows, C) -> (C, rows) in-VMEM transpose."""
    def kern(x_ref, o_ref):
        o_ref[...] = jnp.transpose(x_ref[...].astype(jnp.float32))

    try:
        with jax.ensure_compile_time_eval():
            rows = 1024
            x = (jnp.arange(rows * n_classes, dtype=jnp.float32)
                 .reshape(rows, n_classes).astype(jnp.dtype(dtype_name)))
            y = pl.pallas_call(
                kern,
                out_shape=jax.ShapeDtypeStruct((n_classes, rows), jnp.float32),
            )(x)
            return bool(jnp.allclose(y, x.astype(jnp.float32).T))
    except Exception:
        return False


# --------------------------------------------------------------------------
# Lane-dense kernel (classes on sublanes, rows on lanes) -- used for C < 128.
#   transpose_in_kernel=True : logits block (TL, C), transposed in VMEM.
#   transpose_in_kernel=False: logits block (C, TL) (wrapper transposed).
# target block (1, TL); outputs (1, C, 1) per slice.
# --------------------------------------------------------------------------
def _dd_stats_kernel_lane_dense(logits_ref, target_ref,
                                cnt_ref, err_ref, ce_ref,
                                cnt_acc, err_acc, ce_acc,
                                *, n_rows, transpose_in_kernel):
    p = pl.program_id(0)
    k = pl.program_id(1)
    k_last = pl.num_programs(1) - 1

    @pl.when(k == 0)
    def _init():
        cnt_acc[...] = jnp.zeros_like(cnt_acc)
        err_acc[...] = jnp.zeros_like(err_acc)
        ce_acc[...] = jnp.zeros_like(ce_acc)

    if transpose_in_kernel:
        # Natural (TL, C) tile straight from HBM; repack lane-dense in VMEM
        # (XLU transpose, no extra HBM pass).
        logits = jnp.transpose(logits_ref[...].astype(jnp.float32))   # (C, TL)
    else:
        logits = logits_ref[...].astype(jnp.float32)                  # (C, TL)
    C, TL = logits.shape

    # Mask the ragged tail ONCE on the (1, TL) target row: padded lanes get an
    # impossible class id, so nothing else needs a `valid` AND.
    lane = jax.lax.broadcasted_iota(jnp.int32, (1, TL), 1)
    row = (p * pl.num_programs(1) + k) * TL + lane
    target_f = jnp.where(row < n_rows, target_ref[...], -1).astype(jnp.float32)

    # log_softmax over classes (sublane reductions -> 100% lane density).
    col_max = jnp.max(logits, axis=0, keepdims=True)               # (1, TL)
    shifted = logits - col_max
    lse = jnp.log(jnp.sum(jnp.exp(shifted), axis=0, keepdims=True))
    neg_logp = lse - shifted                                       # (C, TL)

    # argmax over classes (lowest index wins on ties, like jnp/torch argmax).
    cls_idx = jax.lax.broadcasted_iota(jnp.int32, (C, TL), 0).astype(jnp.float32)
    pred = jnp.min(jnp.where(logits == col_max, cls_idx, float(C)),
                   axis=0, keepdims=True)                          # (1, TL)

    onehot = cls_idx == target_f                                   # (C, TL)
    onehot_f = onehot.astype(jnp.float32)
    mispred_f = (pred != target_f).astype(jnp.float32)             # (1, TL)

    # Pure elementwise accumulation; cross-lane reductions happen once/slice.
    cnt_acc[...] += onehot_f
    err_acc[...] += onehot_f * mispred_f
    ce_acc[...] += jnp.where(onehot, neg_logp, 0.0)

    @pl.when(k == k_last)
    def _finalize():
        cnt_ref[...] = jnp.sum(cnt_acc[...], axis=1, keepdims=True).reshape(1, C, 1)
        err_ref[...] = jnp.sum(err_acc[...], axis=1, keepdims=True).reshape(1, C, 1)
        ce_ref[...] = jnp.sum(ce_acc[...], axis=1, keepdims=True).reshape(1, C, 1)


# --------------------------------------------------------------------------
# Row-major kernel (rows on sublanes, classes on lanes) -- used for C >= 128.
# Block shapes: logits (TR, C), target (TR, 1); outputs (1, 1, C) per slice.
# --------------------------------------------------------------------------
def _fold_rows_to_sublanes(x):
    # (TR, C) -> (8, C) by summing groups of 8 rows with plain vector adds
    # (VALU only); partials stay in vregs, no per-tile XLU reduction.
    r = x.shape[0]
    out = x[0:8]
    for i in range(1, r // 8):
        out = out + x[8 * i:8 * i + 8]
    return out


def _dd_stats_kernel_row_major(logits_ref, target_ref,
                               cnt_ref, err_ref, ce_ref,
                               cnt_acc, err_acc, ce_acc, *, n_rows):
    p = pl.program_id(0)
    k = pl.program_id(1)
    k_last = pl.num_programs(1) - 1

    @pl.when(k == 0)
    def _init():
        cnt_acc[...] = jnp.zeros_like(cnt_acc)
        err_acc[...] = jnp.zeros_like(err_acc)
        ce_acc[...] = jnp.zeros_like(ce_acc)

    logits = logits_ref[...].astype(jnp.float32)      # (TR, C)
    TR, C = logits.shape

    sub = jax.lax.broadcasted_iota(jnp.int32, (TR, 1), 0)
    row = (p * pl.num_programs(1) + k) * TR + sub
    target_f = jnp.where(row < n_rows, target_ref[...], -1).astype(jnp.float32)

    row_max = jnp.max(logits, axis=1, keepdims=True)               # (TR, 1)
    shifted = logits - row_max
    lse = jnp.log(jnp.sum(jnp.exp(shifted), axis=1, keepdims=True))
    neg_logp = lse - shifted                                       # (TR, C)

    cls_idx = jax.lax.broadcasted_iota(jnp.int32, (TR, C), 1).astype(jnp.float32)
    pred = jnp.min(jnp.where(logits == row_max, cls_idx, float(C)),
                   axis=1, keepdims=True)                          # (TR, 1)

    onehot = cls_idx == target_f                                   # (TR, C)
    onehot_f = onehot.astype(jnp.float32)
    mispred_f = (pred != target_f).astype(jnp.float32)             # (TR, 1)

    cnt_acc[...] += _fold_rows_to_sublanes(onehot_f)
    err_acc[...] += _fold_rows_to_sublanes(onehot_f * mispred_f)
    ce_acc[...] += _fold_rows_to_sublanes(jnp.where(onehot, neg_logp, 0.0))

    @pl.when(k == k_last)
    def _finalize():
        cnt_ref[...] = jnp.sum(cnt_acc[...], axis=0, keepdims=True).reshape(1, 1, C)
        err_ref[...] = jnp.sum(err_acc[...], axis=0, keepdims=True).reshape(1, 1, C)
        ce_ref[...] = jnp.sum(ce_acc[...], axis=0, keepdims=True).reshape(1, 1, C)


# --------------------------------------------------------------------------
# Wrappers around pallas_call.
# --------------------------------------------------------------------------
def _class_stats_lane_dense(logits, target_i32, *, tile_lanes=None, num_slices=None):
    N, C = logits.shape
    itemsize = jnp.dtype(logits.dtype).itemsize

    if tile_lanes is None:
        # >= ~1 MiB of logits per tile keeps the per-grid-step overhead
        # (~0.35us) hidden behind the DMA on every generation; working set
        # stays far below v7x's 64 MiB per-core VMEM.
        tile_lanes = (1 << 20) // max(C * itemsize, 1)
        tile_lanes = max(128, min(32768, (tile_lanes // 128) * 128))
        tile_lanes = min(tile_lanes, _round_up(N, 128))
    assert tile_lanes % 128 == 0

    n_tiles = pl.cdiv(N, tile_lanes)
    P = num_slices if num_slices is not None else _default_num_slices()
    P = max(1, min(P, n_tiles))
    K = pl.cdiv(n_tiles, P)

    transpose_in_kernel = _in_kernel_transpose_ok(C, jnp.dtype(logits.dtype).name)

    # No jnp.pad anywhere: partial / fully-overhanging blocks are clamped to a
    # valid block index (wasted DMA of at most one tile) and masked in-kernel.
    target_2d = target_i32.reshape(1, N)            # free reshape, no copy
    if transpose_in_kernel:
        logits_in = logits                          # natural (N, C): 1 HBM pass
        logits_spec = pl.BlockSpec(
            (tile_lanes, C),
            lambda p, k: (jnp.minimum(p * K + k, n_tiles - 1), 0))
    else:
        # Fallback when Mosaic can't transpose the tile in VMEM: one extra XLA
        # transpose pass over HBM, kernel then streams (C, N) directly.
        logits_in = logits.T
        logits_spec = pl.BlockSpec(
            (C, tile_lanes),
            lambda p, k: (0, jnp.minimum(p * K + k, n_tiles - 1)))
    target_spec = pl.BlockSpec(
        (1, tile_lanes), lambda p, k: (0, jnp.minimum(p * K + k, n_tiles - 1)))

    # Double-buffered inputs + 3 f32 accumulators; 3x headroom for
    # Mosaic-materialized full-tile temporaries, capped for v7x's 64 MiB VMEM.
    work_set = 2 * (tile_lanes * C * itemsize + tile_lanes * 4) + 3 * C * tile_lanes * 4
    vmem_limit = int(min(48 << 20, max(32 << 20, 3 * work_set)))
    cost = pl.CostEstimate(flops=int(12 * N * C),
                           transcendentals=int(N * C + N),
                           bytes_accessed=int(N * C * itemsize + N * 4 + 3 * P * C * 4))

    kernel = functools.partial(_dd_stats_kernel_lane_dense, n_rows=N,
                               transpose_in_kernel=transpose_in_kernel)
    cnt, err, ce = pl.pallas_call(
        kernel,
        out_shape=(jax.ShapeDtypeStruct((P, C, 1), jnp.float32),) * 3,
        grid_spec=pltpu.PrefetchScalarGridSpec(
            num_scalar_prefetch=0,
            grid=(P, K),
            in_specs=[logits_spec, target_spec],
            out_specs=[pl.BlockSpec((1, C, 1), lambda p, k: (p, 0, 0))
                       for _ in range(3)],
            scratch_shapes=[pltpu.VMEM((C, tile_lanes), jnp.float32)
                            for _ in range(3)],
        ),
        compiler_params=pltpu.CompilerParams(
            dimension_semantics=("parallel", "arbitrary"),
            vmem_limit_bytes=vmem_limit,
        ),
        cost_estimate=cost,
    )(logits_in, target_2d)
    return (cnt.reshape(P, C).sum(axis=0),
            err.reshape(P, C).sum(axis=0),
            ce.reshape(P, C).sum(axis=0))


def _class_stats_row_major(logits, target_i32, *, tile_rows=None, num_slices=None):
    N, C = logits.shape
    itemsize = jnp.dtype(logits.dtype).itemsize

    if tile_rows is None:
        # ~1 MiB logits tile (double-buffered), capped at 1024 rows so the
        # unrolled sublane fold stays short; fits v7x's smaller VMEM too.
        tile_rows = (1 << 20) // max(C * itemsize, 1)
        tile_rows = max(8, min(1024, (tile_rows // 8) * 8))
        tile_rows = min(tile_rows, _round_up(N, 8))
    assert tile_rows % 8 == 0

    n_tiles = pl.cdiv(N, tile_rows)
    P = num_slices if num_slices is not None else _default_num_slices()
    P = max(1, min(P, n_tiles))
    K = pl.cdiv(n_tiles, P)

    target_2d = target_i32.reshape(N, 1)            # free reshape, no copy

    work_set = 2 * (tile_rows * C * itemsize + tile_rows * 4) + 3 * 8 * C * 4
    vmem_limit = int(min(48 << 20, max(32 << 20, 3 * work_set)))
    cost = pl.CostEstimate(flops=int(12 * N * C),
                           transcendentals=int(N * C + N),
                           bytes_accessed=int(N * C * itemsize + N * 4 + 3 * P * C * 4))

    kernel = functools.partial(_dd_stats_kernel_row_major, n_rows=N)
    cnt, err, ce = pl.pallas_call(
        kernel,
        out_shape=(jax.ShapeDtypeStruct((P, 1, C), jnp.float32),) * 3,
        grid_spec=pltpu.PrefetchScalarGridSpec(
            num_scalar_prefetch=0,
            grid=(P, K),
            in_specs=[
                pl.BlockSpec((tile_rows, C),
                             lambda p, k: (jnp.minimum(p * K + k, n_tiles - 1), 0)),
                pl.BlockSpec((tile_rows, 1),
                             lambda p, k: (jnp.minimum(p * K + k, n_tiles - 1), 0)),
            ],
            out_specs=[pl.BlockSpec((1, 1, C), lambda p, k: (p, 0, 0))
                       for _ in range(3)],
            scratch_shapes=[pltpu.VMEM((8, C), jnp.float32) for _ in range(3)],
        ),
        compiler_params=pltpu.CompilerParams(
            dimension_semantics=("parallel", "arbitrary"),
            vmem_limit_bytes=vmem_limit,
        ),
        cost_estimate=cost,
    )(logits, target_2d)
    return (cnt.reshape(P, C).sum(axis=0),
            err.reshape(P, C).sum(axis=0),
            ce.reshape(P, C).sum(axis=0))


def ddloss_pallas(logits, target, weight_init, beta, *,
                  tile=None, num_slices=None, lane_dense=None):
    """logits: (N, C) f32/bf16, target: (N,) int, weight_init: (C,) -> scalar."""
    N, C = logits.shape
    target_i32 = target.astype(jnp.int32)
    if lane_dense is None:
        lane_dense = C < 128
    if lane_dense:
        cnt, err, ce_sum = _class_stats_lane_dense(
            logits, target_i32, tile_lanes=tile, num_slices=num_slices)
    else:
        cnt, err, ce_sum = _class_stats_row_major(
            logits, target_i32, tile_rows=tile, num_slices=num_slices)

    # O(C) finalize (DD_weight.update with weight_dict == weight_init).
    w0 = weight_init.astype(jnp.float32)
    err_rate = jnp.where(cnt > 0, err / jnp.maximum(cnt, 1.0), 0.0)
    weight = jnp.where(err_rate != 0.0, beta * w0 + err_rate, w0 * (1.0 + beta))
    return jnp.sum(weight * ce_sum) / N


# --------------------------------------------------------------------------
# Pure-JAX reference mirroring the PyTorch semantics.
# --------------------------------------------------------------------------
def ddloss_ref(logits, target, weight_init, beta):
    N, C = logits.shape
    logp = jax.nn.log_softmax(logits.astype(jnp.float32), axis=-1)
    pred = jnp.argmax(logp, axis=-1)
    onehot = jax.nn.one_hot(target, C, dtype=jnp.float32)
    cnt = onehot.sum(axis=0)
    err = (onehot * (pred != target)[:, None].astype(jnp.float32)).sum(axis=0)
    err_rate = jnp.where(cnt > 0, err / jnp.maximum(cnt, 1.0), 0.0)
    w0 = weight_init.astype(jnp.float32)
    weight = jnp.where(err_rate != 0.0, beta * w0 + err_rate, w0 * (1.0 + beta))
    ce = -jnp.take_along_axis(logp, target[:, None], axis=1)[:, 0]
    return jnp.sum(weight[target] * ce) / N


if __name__ == "__main__":
    beta = 0.9
    ddloss_jit = jax.jit(ddloss_pallas,
                         static_argnames=("beta", "tile", "num_slices", "lane_dense"))

    key = jax.random.PRNGKey(0)
    k1, k2, k3, k4, k5, k6, k7 = jax.random.split(key, 7)

    # Case 1: toy shape from the module (lane-dense small-C path, one tile).
    N, C = 16, 8
    logits = jax.random.normal(k1, (N, C), dtype=jnp.float32)
    target = jax.random.randint(k2, (N,), 0, C, dtype=jnp.int32)
    w_init = jnp.ones((C,), dtype=jnp.float32)
    loss = ddloss_jit(logits, target, w_init, beta=beta)
    jax.block_until_ready(loss)
    ref = ddloss_ref(logits, target, w_init, beta)
    assert jnp.allclose(loss, ref, rtol=1e-5, atol=1e-5), (loss, ref)

    # Case 2: multi-tile stream + 2-way slice split + unpadded ragged tail.
    N2, C2 = 300, 8
    logits2 = jax.random.normal(k3, (N2, C2), dtype=jnp.float32)
    target2 = jax.random.randint(k4, (N2,), 0, C2, dtype=jnp.int32)
    w_init2 = jax.random.uniform(k5, (C2,), minval=0.5, maxval=1.5, dtype=jnp.float32)
    loss2 = ddloss_jit(logits2, target2, w_init2, beta=beta, tile=128, num_slices=2)
    jax.block_until_ready(loss2)
    ref2 = ddloss_ref(logits2, target2, w_init2, beta)
    assert jnp.allclose(loss2, ref2, rtol=1e-5, atol=1e-5), (loss2, ref2)

    # Case 3: large-C path keeps the natural (N, C) layout (classes on lanes).
    N3, C3 = 200, 128
    logits3 = jax.random.normal(k6, (N3, C3), dtype=jnp.float32)
    target3 = jax.random.randint(k7, (N3,), 0, C3, dtype=jnp.int32)
    w_init3 = jnp.ones((C3,), dtype=jnp.float32)
    loss3 = ddloss_jit(logits3, target3, w_init3, beta=beta, tile=64, num_slices=2)
    jax.block_until_ready(loss3)
    ref3 = ddloss_ref(logits3, target3, w_init3, beta)
    assert jnp.allclose(loss3, ref3, rtol=1e-5, atol=1e-5), (loss3, ref3)

    print("KERNEL_OK")
</pallas_src>

<mosaic_0001>
module attributes {stable_mosaic.version = 11 : i64} {
  func.func @_dd_stats_kernel_lane_dense(%arg0: i32, %arg1: i32, %arg2: memref<8x128xf32, #tpu.memory_space<vmem>>, %arg3: memref<1x128xi32, #tpu.memory_space<vmem>>, %arg4: memref<1x8x1xf32, #tpu.memory_space<vmem>>, %arg5: memref<1x8x1xf32, #tpu.memory_space<vmem>>, %arg6: memref<1x8x1xf32, #tpu.memory_space<vmem>>, %arg7: memref<8x128xf32, #tpu.memory_space<vmem>>, %arg8: memref<8x128xf32, #tpu.memory_space<vmem>>, %arg9: memref<8x128xf32, #tpu.memory_space<vmem>>) attributes {dimension_semantics = [#tpu.dimension_semantics<parallel>, #tpu.dimension_semantics<arbitrary>], iteration_bounds = array<i64: 1, 1>, scalar_prefetch = 0 : i64, scratch_operands = 3 : i64, tpu.core_type = #tpu.core_type<tc>, window_params = [{transform_indices = @transform_0, window_bounds = array<i64: 8, 128>}, {transform_indices = @transform_1, window_bounds = array<i64: 1, 128>}, {transform_indices = @transform_2, window_bounds = array<i64: 1, 8, 1>}, {transform_indices = @transform_3, window_bounds = array<i64: 1, 8, 1>}, {transform_indices = @transform_4, window_bounds = array<i64: 1, 8, 1>}]} {
    %c0_i32 = arith.constant 0 : i32
    %0 = arith.cmpi eq, %arg1, %c0_i32 : i32
    %1 = arith.extui %0 : i1 to i32
    %c0_i32_0 = arith.constant 0 : i32
    %2 = arith.cmpi ne, %1, %c0_i32_0 : i32
    scf.if %2 {
      %cst_22 = arith.constant 0.000000e+00 : f32
      %57 = vector.broadcast %cst_22 : f32 to vector<8x128xf32>
      %c0_23 = arith.constant 0 : index
      %c0_24 = arith.constant 0 : index
      %58 = vector.load %arg7[%c0_23, %c0_24] : memref<8x128xf32, #tpu.memory_space<vmem>>, vector<8x128xf32>
      tpu.vector_store %arg7[%c0_23, %c0_24], %57 {strides = array<i32>} : memref<8x128xf32, #tpu.memory_space<vmem>>, vector<8x128xf32>,
      %cst_25 = arith.constant 0.000000e+00 : f32
      %59 = vector.broadcast %cst_25 : f32 to vector<8x128xf32>
      %c0_26 = arith.constant 0 : index
      %c0_27 = arith.constant 0 : index
      %60 = vector.load %arg8[%c0_26, %c0_27] : memref<8x128xf32, #tpu.memory_space<vmem>>, vector<8x128xf32>
      tpu.vector_store %arg8[%c0_26, %c0_27], %59 {strides = array<i32>} : memref<8x128xf32, #tpu.memory_space<vmem>>, vector<8x128xf32>,
      %cst_28 = arith.constant 0.000000e+00 : f32
      %61 = vector.broadcast %cst_28 : f32 to vector<8x128xf32>
      %c0_29 = arith.constant 0 : index
      %c0_30 = arith.constant 0 : index
      %62 = vector.load %arg9[%c0_29, %c0_30] : memref<8x128xf32, #tpu.memory_space<vmem>>, vector<8x128xf32>
      tpu.vector_store %arg9[%c0_29, %c0_30], %61 {strides = array<i32>} : memref<8x128xf32, #tpu.memory_space<vmem>>, vector<8x128xf32>,
    } else {
    }
    %c0 = arith.constant 0 : index
    %c0_1 = arith.constant 0 : index
    %3 = vector.load %arg2[%c0, %c0_1] : memref<8x128xf32, #tpu.memory_space<vmem>>, vector<8x128xf32>
    %4 = tpu.iota {dimensions = array<i32: 1>} : vector<1x128xi32>
    %c1_i32 = arith.constant 1 : i32
    %5 = arith.muli %arg0, %c1_i32 : i32
    %6 = arith.addi %5, %arg1 : i32
    %c128_i32 = arith.constant 128 : i32
    %7 = arith.muli %6, %c128_i32 : i32
    %8 = vector.broadcast %7 : i32 to vector<1x128xi32>
    %9 = arith.addi %8, %4 : vector<1x128xi32>
    %c16_i32 = arith.constant 16 : i32
    %10 = vector.broadcast %c16_i32 : i32 to vector<1x128xi32>
    %11 = arith.cmpi slt, %9, %10 : vector<1x128xi32>
    %c0_2 = arith.constant 0 : index
    %c0_3 = arith.constant 0 : index
    %12 = vector.load %arg3[%c0_2, %c0_3] : memref<1x128xi32, #tpu.memory_space<vmem>>, vector<1x128xi32>
    %c-1_i32 = arith.constant -1 : i32
    %13 = vector.broadcast %c-1_i32 : i32 to vector<1x128xi32>
    %14 = arith.select %11, %12, %13 : vector<1x128xi1>, vector<1x128xi32>
    %15 = arith.sitofp %14 : vector<1x128xi32> to vector<1x128xf32>
    %cst = arith.constant dense<0xFF800000> : vector<128xf32>
    %16 = vector.multi_reduction <maximumf>, %3, %cst [0] : vector<8x128xf32> to vector<128xf32>
    %17 = vector.shape_cast %16 : vector<128xf32> to vector<1x128xf32>
    %18 = vector.broadcast %17 : vector<1x128xf32> to vector<8x128xf32>
    %19 = arith.subf %3, %18 : vector<8x128xf32>
    %20 = math.exp %19 : vector<8x128xf32>
    %cst_4 = arith.constant dense<0.000000e+00> : vector<128xf32>
    %21 = vector.multi_reduction <add>, %20, %cst_4 [0] : vector<8x128xf32> to vector<128xf32>
    %22 = vector.shape_cast %21 : vector<128xf32> to vector<1x128xf32>
    %23 = math.log %22 : vector<1x128xf32>
    %24 = vector.broadcast %23 : vector<1x128xf32> to vector<8x128xf32>
    %25 = arith.subf %24, %19 : vector<8x128xf32>
    %26 = tpu.iota {dimensions = array<i32: 0>} : vector<8x128xi32>
    %27 = arith.sitofp %26 : vector<8x128xi32> to vector<8x128xf32>
    %28 = vector.broadcast %17 : vector<1x128xf32> to vector<8x128xf32>
    %29 = arith.cmpf oeq, %3, %28 : vector<8x128xf32>
    %cst_5 = arith.constant 8.000000e+00 : f32
    %30 = vector.broadcast %cst_5 : f32 to vector<8x128xf32>
    %31 = arith.select %29, %27, %30 : vector<8x128xi1>, vector<8x128xf32>
    %cst_6 = arith.constant dense<0x7F800000> : vector<128xf32>
    %32 = vector.multi_reduction <minimumf>, %31, %cst_6 [0] : vector<8x128xf32> to vector<128xf32>
    %33 = vector.shape_cast %32 : vector<128xf32> to vector<1x128xf32>
    %34 = vector.broadcast %15 : vector<1x128xf32> to vector<8x128xf32>
    %35 = arith.cmpf oeq, %27, %34 : vector<8x128xf32>
    %36 = arith.extui %35 : vector<8x128xi1> to vector<8x128xi32>
    %37 = arith.sitofp %36 : vector<8x128xi32> to vector<8x128xf32>
    %38 = arith.cmpf one, %33, %15 : vector<1x128xf32>
    %39 = arith.extui %38 : vector<1x128xi1> to vector<1x128xi32>
    %40 = arith.sitofp %39 : vector<1x128xi32> to vector<1x128xf32>
    %c0_7 = arith.constant 0 : index
    %c0_8 = arith.constant 0 : index
    %41 = vector.load %arg7[%c0_7, %c0_8] : memref<8x128xf32, #tpu.memory_space<vmem>>, vector<8x128xf32>
    %42 = arith.addf %41, %37 : vector<8x128xf32>
    %c0_9 = arith.constant 0 : index
    %c0_10 = arith.constant 0 : index
    %43 = vector.load %arg7[%c0_9, %c0_10] : memref<8x128xf32, #tpu.memory_space<vmem>>, vector<8x128xf32>
    tpu.vector_store %arg7[%c0_9, %c0_10], %42 {strides = array<i32>} : memref<8x128xf32, #tpu.memory_space<vmem>>, vector<8x128xf32>,
    %c0_11 = arith.constant 0 : index
    %c0_12 = arith.constant 0 : index
    %44 = vector.load %arg8[%c0_11, %c0_12] : memref<8x128xf32, #tpu.memory_space<vmem>>, vector<8x128xf32>
    %45 = vector.broadcast %40 : vector<1x128xf32> to vector<8x128xf32>
    %46 = arith.mulf %37, %45 : vector<8x128xf32>
    %47 = arith.addf %44, %46 : vector<8x128xf32>
    %c0_13 = arith.constant 0 : index
    %c0_14 = arith.constant 0 : index
    %48 = vector.load %arg8[%c0_13, %c0_14] : memref<8x128xf32, #tpu.memory_space<vmem>>, vector<8x128xf32>
    tpu.vector_store %arg8[%c0_13, %c0_14], %47 {strides = array<i32>} : memref<8x128xf32, #tpu.memory_space<vmem>>, vector<8x128xf32>,
    %c0_15 = arith.constant 0 : index
    %c0_16 = arith.constant 0 : index
    %49 = vector.load %arg9[%c0_15, %c0_16] : memref<8x128xf32, #tpu.memory_space<vmem>>, vector<8x128xf32>
    %cst_17 = arith.constant 0.000000e+00 : f32
    %50 = vector.broadcast %cst_17 : f32 to vector<8x128xf32>
    %51 = arith.select %35, %25, %50 : vector<8x128xi1>, vector<8x128xf32>
    %52 = arith.addf %49, %51 : vector<8x128xf32>
    %c0_18 = arith.constant 0 : index
    %c0_19 = arith.constant 0 : index
    %53 = vector.load %arg9[%c0_18, %c0_19] : memref<8x128xf32, #tpu.memory_space<vmem>>, vector<8x128xf32>
    tpu.vector_store %arg9[%c0_18, %c0_19], %52 {strides = array<i32>} : memref<8x128xf32, #tpu.memory_space<vmem>>, vector<8x128xf32>,
    %c0_i32_20 = arith.constant 0 : i32
    %54 = arith.cmpi eq, %arg1, %c0_i32_20 : i32
    %55 = arith.extui %54 : i1 to i32
    %c0_i32_21 = arith.constant 0 : i32
    %56 = arith.cmpi ne, %55, %c0_i32_21 : i32
    scf.if %56 {
      %c0_22 = arith.constant 0 : index
      %c0_23 = arith.constant 0 : index
      %57 = vector.load %arg7[%c0_22, %c0_23] : memref<8x128xf32, #tpu.memory_space<vmem>>, vector<8x128xf32>
      %cst_24 = arith.constant dense<0.000000e+00> : vector<8xf32>
      %58 = vector.multi_reduction <add>, %57, %cst_24 [1] : vector<8x128xf32> to vector<8xf32>
      %59 = vector.shape_cast %58 : vector<8xf32> to vector<8x1xf32>
      %60 = vector.shape_cast %59 : vector<8x1xf32> to vector<1x8x1xf32>
      %c0_25 = arith.constant 0 : index
      %c0_26 = arith.constant 0 : index
      %c0_27 = arith.constant 0 : index
      %61 = vector.load %arg4[%c0_25, %c0_26, %c0_27] : memref<1x8x1xf32, #tpu.memory_space<vmem>>, vector<1x8x1xf32>
      tpu.vector_store %arg4[%c0_25, %c0_26, %c0_27], %60 {strides = array<i32>} : memref<1x8x1xf32, #tpu.memory_space<vmem>>, vector<1x8x1xf32>,
      %c0_28 = arith.constant 0 : index
      %c0_29 = arith.constant 0 : index
      %62 = vector.load %arg8[%c0_28, %c0_29] : memref<8x128xf32, #tpu.memory_space<vmem>>, vector<8x128xf32>
      %cst_30 = arith.constant dense<0.000000e+00> : vector<8xf32>
      %63 = vector.multi_reduction <add>, %62, %cst_30 [1] : vector<8x128xf32> to vector<8xf32>
      %64 = vector.shape_cast %63 : vector<8xf32> to vector<8x1xf32>
      %65 = vector.shape_cast %64 : vector<8x1xf32> to vector<1x8x1xf32>
      %c0_31 = arith.constant 0 : index
      %c0_32 = arith.constant 0 : index
      %c0_33 = arith.constant 0 : index
      %66 = vector.load %arg5[%c0_31, %c0_32, %c0_33] : memref<1x8x1xf32, #tpu.memory_space<vmem>>, vector<1x8x1xf32>
      tpu.vector_store %arg5[%c0_31, %c0_32, %c0_33], %65 {strides = array<i32>} : memref<1x8x1xf32, #tpu.memory_space<vmem>>, vector<1x8x1xf32>,
      %c0_34 = arith.constant 0 : index
      %c0_35 = arith.constant 0 : index
      %67 = vector.load %arg9[%c0_34, %c0_35] : memref<8x128xf32, #tpu.memory_space<vmem>>, vector<8x128xf32>
      %cst_36 = arith.constant dense<0.000000e+00> : vector<8xf32>
      %68 = vector.multi_reduction <add>, %67, %cst_36 [1] : vector<8x128xf32> to vector<8xf32>
      %69 = vector.shape_cast %68 : vector<8xf32> to vector<8x1xf32>
      %70 = vector.shape_cast %69 : vector<8x1xf32> to vector<1x8x1xf32>
      %c0_37 = arith.constant 0 : index
      %c0_38 = arith.constant 0 : index
      %c0_39 = arith.constant 0 : index
      %71 = vector.load %arg6[%c0_37, %c0_38, %c0_39] : memref<1x8x1xf32, #tpu.memory_space<vmem>>, vector<1x8x1xf32>
      tpu.vector_store %arg6[%c0_37, %c0_38, %c0_39], %70 {strides = array<i32>} : memref<1x8x1xf32, #tpu.memory_space<vmem>>, vector<1x8x1xf32>,
    } else {
    }
    return
  }
  func.func @transform_0(%arg0: i32, %arg1: i32) -> (i32, i32) {
    %c1_i32 = arith.constant 1 : i32
    %0 = arith.muli %arg0, %c1_i32 : i32
    %1 = arith.addi %0, %arg1 : i32
    %c0_i32 = arith.constant 0 : i32
    %2 = arith.minsi %1, %c0_i32 : i32
    %c0_i32_0 = arith.constant 0 : i32
    %c0_i32_1 = arith.constant 0 : i32
    return %c0_i32_0, %2 : i32, i32
  }
  func.func @transform_1(%arg0: i32, %arg1: i32) -> (i32, i32) {
    %c1_i32 = arith.constant 1 : i32
    %0 = arith.muli %arg0, %c1_i32 : i32
    %1 = arith.addi %0, %arg1 : i32
    %c0_i32 = arith.constant 0 : i32
    %2 = arith.minsi %1, %c0_i32 : i32
    %c0_i32_0 = arith.constant 0 : i32
    %c0_i32_1 = arith.constant 0 : i32
    return %c0_i32_0, %2 : i32, i32
  }
  func.func @transform_2(%arg0: i32, %arg1: i32) -> (i32, i32, i32) {
    %c0_i32 = arith.constant 0 : i32
    %c0_i32_0 = arith.constant 0 : i32
    %c0_i32_1 = arith.constant 0 : i32
    return %arg0, %c0_i32, %c0_i32_0 : i32, i32, i32
  }
  func.func @transform_3(%arg0: i32, %arg1: i32) -> (i32, i32, i32) {
    %c0_i32 = arith.constant 0 : i32
    %c0_i32_0 = arith.constant 0 : i32
    %c0_i32_1 = arith.constant 0 : i32
    return %arg0, %c0_i32, %c0_i32_0 : i32, i32, i32
  }
  func.func @transform_4(%arg0: i32, %arg1: i32) -> (i32, i32, i32) {
    %c0_i32 = arith.constant 0 : i32
    %c0_i32_0 = arith.constant 0 : i32
    %c0_i32_1 = arith.constant 0 : i32
    return %arg0, %c0_i32, %c0_i32_0 : i32, i32, i32
  }
}

</mosaic_0001>

<llo_original>
// kernel: ddloss_pallas.1
$region0: #{ddloss_pallas.1}
  #allocation0 [shape = 'u32[]', space=smem, size = 0x4, offset = 0x4, fixed_abs, tag = 'smem constant byte address 0x4 - core index']
  #allocation1 [shape = 'u32[72,128]{1,0:T(1,128)}', space=vmem, size = 0x9000, scoped, tag = 'internal scratch']
  #allocation2 [shape = 'f32[8,128]{1,0:T(8,128)}', space=vmem, size = 0x1000, scoped, tag = 'scratch operand']
  #allocation3 [shape = 'f32[8,128]{1,0:T(8,128)}', space=vmem, size = 0x1000, scoped, tag = 'scratch operand']
  #allocation4 [shape = 'f32[8,128]{1,0:T(8,128)}', space=vmem, size = 0x1000, scoped, tag = 'scratch operand']
  %s0 = inlined_call_operand.hbm [shape: f32[8,16], index: 0, kind: input, shape index: {}]
  %s1 = inlined_call_operand.vmem [shape: s32[1,16], index: 1, kind: input, shape index: {}]
  %s2 = inlined_call_operand.vmem [shape: f32[1,8,1], index: 2, kind: output, shape index: {0}]
  %s3 = inlined_call_operand.vmem [shape: f32[1,8,1], index: 3, kind: output, shape index: {1}]
  %s4 = inlined_call_operand.vmem [shape: f32[1,8,1], index: 4, kind: output, shape index: {2}]
  %5 = xla_tuple %s2, %s3, %s4
  %s6 = sld [smem:[#allocation0]]
  $region46: #{ddloss_pallas.1} parent=0
    _
  %s8 = ssub.s32 1, %s6
  %s9 = scalar_select 0, %s8, %s6
  $region1: #{ddloss_pallas.1} parent=0
    #allocation5 [shape = 'u8[4096]{0}', space=vmem, size = 0x1000, scoped, tag = 'input window, operand 0, single buffered']
    #allocation6 [shape = 's32[1]{0}', space=sflag, size = 0x4, scoped, tag = 'scoped memory for ddloss_pallas.1']
    %10 = vsyncpa [#allocation6], 0
    // Predicated region
    $region2: #{ddloss_pallas.1} parent=1 // pred_check
      _
    $region3: #{ddloss_pallas.1} parent=1 // pred_check_branch
      %12 = sbr.rel (0) target = $region5
    $region4: #{ddloss_pallas.1} parent=1 // pred_region
      %s13 = sadd.s32 0, 0
      %p14 = scmp.lt.s32.totalorder %s13, 0
      %s15 = scalar_select %p14, %s13, 0
      %17 = vsyncadd [#allocation6], 0
      %s18 = smul.addr %s15, 8
      %s19 = scalar_lea.hbm %s0, %s18
      %s21 = sshll.u32 %s19, 4
      %s22 = int_to_ptr.hbm [resolvable:$true] %s21
      %s23 = sshll.u32 [#allocation5], 4
      %s24 = int_to_ptr.vmem [resolvable:$true] %s23
      %26 = dma.hbm_to_vmem [thread:$0]  %s22, 128, %s24, [#allocation6]
    $region5: #{ddloss_pallas.1} parent=1 // pred_fallthru
      _
    // Predicated region
    $region6: #{ddloss_pallas.1} parent=1 // pred_check
      _
    $region7: #{ddloss_pallas.1} parent=1 // pred_check_branch
      %28 = sbr.rel (0) target = $region9
    $region8: #{ddloss_pallas.1} parent=1 // pred_region
      %s29 = sadd.s32 0, 0
      %p30 = scmp.lt.s32.totalorder %s29, 0
      %s31 = scalar_select %p30, %s29, 0
      %p32 = scmp.lt.s32.totalorder %s31, 0
      %s33 = scalar_select %p32, %s31, 0
      %s34 = scalar_lea.vmem %s1, %s33
      %s35 = sadd.s32 0, 0
      %p36 = scmp.lt.s32.totalorder %s35, 0
      %s37 = scalar_select %p36, %s35, 0
    $region9: #{ddloss_pallas.1} parent=1 // pred_fallthru
      _
    // Predicated region
    $region10: #{ddloss_pallas.1} parent=1 // pred_check
      _
    $region11: #{ddloss_pallas.1} parent=1 // pred_check_branch
      %39 = sbr.rel (0) target = $region13
    $region12: #{ddloss_pallas.1} parent=1 // pred_region
      %41 = dma.done [#allocation6], 128
    $region13: #{ddloss_pallas.1} parent=1 // pred_fallthru
      _
    %s42 = sadd.s32 0, 0
    %p43 = scmp.lt.s32.totalorder %s42, 0
    %s44 = scalar_select %p43, %s42, 0
    %p45 = scmp.lt.s32.totalorder %s44, 0
    %s46 = scalar_select %p45, %s44, 0
    %s47 = scalar_lea.vmem %s1, %s46
    %s48 = sadd.s32 0, 0
    %p49 = scmp.lt.s32.totalorder %s48, 0
    %s50 = scalar_select %p49, %s48, 0
    %s51 = sadd.s32 0, 0
    %p52 = scmp.lt.s32.totalorder %s51, 0
    %s53 = scalar_select %p52, %s51, 0
    %p54 = scmp.lt.s32.totalorder %s53, 0
    %s55 = scalar_select %p54, %s53, 0
    %s56 = scalar_lea.vmem %s1, %s55
    %s57 = sadd.s32 0, 0
    %p58 = scmp.lt.s32.totalorder %s57, 0
    %s59 = scalar_select %p58, %s57, 0
    %p60 = scmp.eq.s32.totalorder 0, 0
    // Predicated region
    $region14: #{ddloss_pallas.1} parent=1 // pred_check
      %p61 = pneg %p60
    $region15: #{ddloss_pallas.1} parent=1 // pred_check_branch
      %63 = sbr.rel (%p61) target = $region17
    $region16: #{ddloss_pallas.1} parent=1 // pred_region
      %64 = vst [vmem:[#allocation2] sm:$0xff] 0.0
      %65 = vst [vmem:[#allocation3] sm:$0xff] 0.0
      %66 = vst [vmem:[#allocation4] sm:$0xff] 0.0
    $region17: #{ddloss_pallas.1} parent=1 // pred_fallthru
      _
    %v67 = vld [vmem:[#allocation5] sm:$0xff]
    %v68 = vlaneseq
    %v69 = vand.u32 %v68, 127
    %s70 = sadd.s32 0, 0
    %s71 = smul.u32 %s70, 128
    %v72 = vstv %s71
    %v73 = vadd.s32 %v72, %v69
    %vm74 = vcmp.lt.s32.totalorder %v73, 16
    %v75 = vld [vmem:[%s56] sm:$0x1]
    %v76 = vsel %vm74, %v75, 4294967295
    %v77 = vcvt.s32.f32 %v76
    %v78 = vrot.slane %v67, 4
    %v79 = vmax.f32 %v67, %v78
    %v80 = vrot.slane %v79, 2
    %v81 = vmax.f32 %v79, %v80
    %v82 = vrot.slane %v81, 1
    %v83 = vmax.f32 %v81, %v82
    %v84 = vsub.f32 %v67, %v83
    %v85 = vmul.f32 %v84, 1.442695
    %v86 = vpow.pop %v85
    %v87 = vrot.slane %v86, 4
    %v88 = vadd.f32 %v86, %v87
    %v89 = vrot.slane %v88, 2
    %v90 = vadd.f32 %v88, %v89
    %v91 = vrot.slane %v90, 1
    %v92 = vadd.f32 %v90, %v91
    %v93 = vlog2.pop %v92
    %v94 = vmul.f32 %v93, 0.6931472
    %v95 = vsub.f32 %v94, %v84
    %v96 = vlaneseq
    %v97 = vshrl.u32 %v96, 7
    %v98 = vcvt.s32.f32 %v97
    %vm99 = vcmp.eq.f32.partialorder %v67, %v83
    %v100 = vsel %vm99, %v98, 8.0
    %v101 = vrot.slane %v100, 4
    %v102 = vmin.f32 %v100, %v101
    %v103 = vrot.slane %v102, 2
    %v104 = vmin.f32 %v102, %v103
    %v105 = vrot.slane %v104, 1
    %v106 = vmin.f32 %v104, %v105
    %v107 = vperm.slane %v77, 0
    %vm108 = vcmp.eq.f32.partialorder %v98, %v107
    %v109 = vsel %vm108, 1, 0
    %v110 = vcvt.s32.f32 %v109
    %vm111 = vcmp.ne.f32.partialorder %v106, %v77
    %v112 = vsel %vm111, 1, 0
    %v113 = vcvt.s32.f32 %v112
    %v114 = vld [vmem:[#allocation2] sm:$0xff]
    %v115 = vadd.f32 %v114, %v110
    %116 = vst [vmem:[#allocation2] sm:$0xff] %v115
    %v117 = vld [vmem:[#allocation3] sm:$0xff]
    %v118 = vperm.slane %v113, 0
    %v119 = vmul.f32 %v110, %v118
    %v120 = vadd.f32 %v117, %v119
    %121 = vst [vmem:[#allocation3] sm:$0xff] %v120
    %v122 = vld [vmem:[#allocation4] sm:$0xff]
    %v123 = vsel %vm108, %v95, 0.0
    %v124 = vadd.f32 %v122, %v123
    %125 = vst [vmem:[#allocation4] sm:$0xff] %v124
    // Predicated region
    $region18: #{ddloss_pallas.1} parent=1 // pred_check
      %p126 = pneg %p60
    $region19: #{ddloss_pallas.1} parent=1 // pred_check_branch
      %128 = sbr.rel (%p126) target = $region21
    $region20: #{ddloss_pallas.1} parent=1 // pred_region
      %v129 = vld [vmem:[#allocation2] sm:$0xff]
      %130 = vadd.xlane.f32.xlu0 %v129
      %v131 = vpop.xlane.xlu0 %130
      %vm132 = vcmask 7168
      %133 = vst.msk [vmem:[%s2] sm:$0xff] %vm132, %v131
      %v134 = vld [vmem:[#allocation3] sm:$0xff]
      %135 = vadd.xlane.f32.xlu0 %v134
      %v136 = vpop.xlane.xlu0 %135
      %137 = vst.msk [vmem:[%s3] sm:$0xff] %vm132, %v136
      %v138 = vld [vmem:[#allocation4] sm:$0xff]
      %139 = vadd.xlane.f32.xlu0 %v138
      %v140 = vpop.xlane.xlu0 %139
      %141 = vst.msk [vmem:[%s4] sm:$0xff] %vm132, %v140
    $region21: #{ddloss_pallas.1} parent=1 // pred_fallthru
      _
    // Predicated region
    $region22: #{ddloss_pallas.1} parent=1 // pred_check
      _
    $region23: #{ddloss_pallas.1} parent=1 // pred_check_branch
      %143 = sbr.rel (0) target = $region25
    $region24: #{ddloss_pallas.1} parent=1 // pred_region
      _
    $region25: #{ddloss_pallas.1} parent=1 // pred_fallthru
      _
    // Predicated region
    $region26: #{ddloss_pallas.1} parent=1 // pred_check
      _
    $region27: #{ddloss_pallas.1} parent=1 // pred_check_branch
      %145 = sbr.rel (0) target = $region29
    $region28: #{ddloss_pallas.1} parent=1 // pred_region
      _
    $region29: #{ddloss_pallas.1} parent=1 // pred_fallthru
      _
    // Predicated region
    $region30: #{ddloss_pallas.1} parent=1 // pred_check
      _
    $region31: #{ddloss_pallas.1} parent=1 // pred_check_branch
      %147 = sbr.rel (0) target = $region33
    $region32: #{ddloss_pallas.1} parent=1 // pred_region
      _
    $region33: #{ddloss_pallas.1} parent=1 // pred_fallthru
      _
    // Predicated region
    $region34: #{ddloss_pallas.1} parent=1 // pred_check
      _
    $region35: #{ddloss_pallas.1} parent=1 // pred_check_branch
      %149 = sbr.rel (0) target = $region37
    $region36: #{ddloss_pallas.1} parent=1 // pred_region
      _
    $region37: #{ddloss_pallas.1} parent=1 // pred_fallthru
      _
    // Predicated region
    $region38: #{ddloss_pallas.1} parent=1 // pred_check
      _
    $region39: #{ddloss_pallas.1} parent=1 // pred_check_branch
      %151 = sbr.rel (0) target = $region41
    $region40: #{ddloss_pallas.1} parent=1 // pred_region
      _
    $region41: #{ddloss_pallas.1} parent=1 // pred_fallthru
      _
    // Predicated region
    $region42: #{ddloss_pallas.1} parent=1 // pred_check
      _
    $region43: #{ddloss_pallas.1} parent=1 // pred_check_branch
      %153 = sbr.rel (0) target = $region45
    $region44: #{ddloss_pallas.1} parent=1 // pred_region
      _
    $region45: #{ddloss_pallas.1} parent=1 // pred_fallthru
      _
    %154 = vsyncpa [#allocation6], 1

</llo_original>
